<compile_context>
chip_gen: v7x
topology: tpu7x:2x2x1
jax: 0.10.0
libtpu: 0.0.40
codegen_flags: <defaults>
</compile_context>

<pallas_src>
import functools

import jax
import jax.numpy as jnp
from jax import lax
from jax.experimental import pallas as pl
from jax.experimental.pallas import tpu as pltpu

N_EMBD = 32          # C
BLOCK_SIZE = 256     # max sequence length (tril buffer size in PyTorch)
DROPOUT_P = 0.2      # nn.Dropout(0.2) -- identity in eval mode (see TODO below)

# Soft cap on the in-kernel (Bt, T, T) f32 score buffer; keeps total transient
# VMEM (scores + exp + bf16 copy + double-buffered inputs) comfortably inside
# the scoped limit on v5e/v6e/v7x.
_SCORE_VMEM_BUDGET_BYTES = 6 * 1024 * 1024


def _head_kernel(x_ref, w_ref, o_ref, *, compute_dtype):
    # x_ref: (Bt, T, C)   a block of batch elements
    # w_ref: (C, 3H)      fused [Wk | Wq | Wv]
    # o_ref: (Bt, H, T)   output, transposed so T sits on the lane axis
    Bt, T, C = x_ref.shape
    H = w_ref.shape[1] // 3

    x = x_ref[...]                                   # (Bt, T, C) f32
    w = w_ref[...]                                   # (C, 3H)

    # Fused QKV projection: one (Bt*T, C) @ (C, 3H) MXU push, f32 accumulation.
    # Collapsing (Bt, T) is tile-aligned (T % 8 == 0 or T == full dim), so the
    # reshape is free.
    x2 = x.reshape(Bt * T, C).astype(compute_dtype)
    qkv = jnp.dot(x2, w.astype(compute_dtype),
                  preferred_element_type=jnp.float32).reshape(Bt, T, 3 * H)
    k = qkv[:, :, 0:H]
    q = qkv[:, :, H:2 * H]
    v = qkv[:, :, 2 * H:3 * H]

    # Scores.  Scale (C**-0.5, matching PyTorch which uses n_embd, not
    # head_size) is folded into q (16x cheaper than scaling the (T,T) scores).
    # Contraction over the head dim is expressed directly -> no k.T copy.
    scale = C ** (-0.5)
    qs = (q * scale).astype(compute_dtype)
    wei = lax.dot_general(
        qs, k.astype(compute_dtype),
        dimension_numbers=(((2,), (2,)), ((0,), (0,))),
        preferred_element_type=jnp.float32)          # (Bt, T, T) f32

    # Causal mask from small broadcast iotas (no full (T,T) int32 planes).
    row = lax.broadcasted_iota(jnp.int32, (1, T, 1), 1)
    col = lax.broadcasted_iota(jnp.int32, (1, 1, T), 2)
    wei = jnp.where(col <= row, wei, -jnp.inf)

    # Numerically stable softmax; elementwise math stays f32 (v5e-safe).
    wei_max = jnp.max(wei, axis=-1, keepdims=True)   # (Bt, T, 1)
    e = jnp.exp(wei - wei_max)                       # (Bt, T, T) f32
    denom = jnp.sum(e, axis=-1)                      # (Bt, T)

    # TODO(synk): nn.Dropout(0.2) on the attention weights is identity in eval
    # mode; training-mode dropout (with PyTorch-matching RNG) not reproduced.

    # Attention output produced transposed (Bt, H, T) so the store is
    # lane-dense in T.  out_T[b,h,t] = sum_s v[b,s,h] * e[b,t,s].
    out_t = lax.dot_general(
        v.astype(compute_dtype), e.astype(compute_dtype),
        dimension_numbers=(((1,), (2,)), ((0,), (0,))),
        preferred_element_type=jnp.float32)          # (Bt, H, T)

    # 1/denom folded into the (H, T) output (16x fewer multiplies than
    # normalizing the (T, T) probabilities); EUP approximate reciprocal.
    inv = pl.reciprocal(denom, approx=True).reshape(Bt, 1, T)
    o_ref[...] = (out_t * inv).astype(o_ref.dtype)


def head_forward(x, wk, wq, wv, *, batch_block=None,
                 compute_dtype=jnp.bfloat16):
    """x: (B, T, C); w*: (C, H). Returns (B, T, H).

    compute_dtype: dtype of the MXU operands (accumulation is always f32).
    """
    B, T, C = x.shape
    H = wk.shape[1]
    w_qkv = jnp.concatenate([wk, wq, wv], axis=1)    # (C, 3H): single operand

    if batch_block is None:
        # Keep >= 2 parallel grid steps when possible (v7x has 2 TensorCores).
        batch_block = max(1, B // 2)
    # Cap the per-step (Bt, T, T) f32 score block to the VMEM budget.
    vmem_cap = max(1, _SCORE_VMEM_BUDGET_BYTES // (T * T * 4))
    batch_block = max(1, min(batch_block, vmem_cap, B))

    n_steps = pl.cdiv(B, batch_block)
    B_pad = n_steps * batch_block
    if B_pad != B:
        x = jnp.pad(x, ((0, B_pad - B), (0, 0), (0, 0)))

    # TODO(synk): for T well above BLOCK_SIZE, tile the (T, T) score block over
    # query rows (flash-style) instead of only shrinking batch_block; at
    # T <= 256 the full score block fits comfortably on all generations.
    kernel = functools.partial(_head_kernel, compute_dtype=compute_dtype)
    out_t = pl.pallas_call(
        kernel,
        out_shape=jax.ShapeDtypeStruct((B_pad, H, T), x.dtype),
        grid_spec=pltpu.PrefetchScalarGridSpec(
            num_scalar_prefetch=0,
            grid=(n_steps,),
            in_specs=[
                pl.BlockSpec((batch_block, T, C), lambda b: (b, 0, 0)),
                pl.BlockSpec((C, 3 * H), lambda b: (0, 0)),
            ],
            out_specs=pl.BlockSpec((batch_block, H, T), lambda b: (b, 0, 0)),
        ),
        compiler_params=pltpu.CompilerParams(
            dimension_semantics=("parallel",),
        ),
    )(x, w_qkv)

    # Transpose the lane-dense (B, H, T) kernel output back to module layout.
    return jnp.swapaxes(out_t, 1, 2)[:B]


def reference_forward(x, wk, wq, wv):
    """Pure-JAX f32 reference matching the PyTorch forward (eval mode)."""
    B, T, C = x.shape
    k = x @ wk
    q = x @ wq
    v = x @ wv
    wei = (q @ jnp.swapaxes(k, -2, -1)) * (C ** -0.5)
    tril = jnp.tril(jnp.ones((T, T), dtype=bool))
    wei = jnp.where(tril, wei, -jnp.inf)
    wei = jax.nn.softmax(wei, axis=-1)
    return wei @ v


if __name__ == "__main__":
    B, T, C = 4, 8, N_EMBD
    head_size = 16
    assert T <= BLOCK_SIZE

    key = jax.random.PRNGKey(0)
    kx, kk, kq, kv = jax.random.split(key, 4)

    x = jax.random.normal(kx, (B, T, C), dtype=jnp.float32)
    # nn.Linear(n_embd, head_size, bias=False) weight has shape (head_size, C);
    # we store the transposed (C, head_size) layout for x @ W.
    bound = 1.0 / (C ** 0.5)
    wk = jax.random.uniform(kk, (C, head_size), jnp.float32, -bound, bound)
    wq = jax.random.uniform(kq, (C, head_size), jnp.float32, -bound, bound)
    wv = jax.random.uniform(kv, (C, head_size), jnp.float32, -bound, bound)

    ref = reference_forward(x, wk, wq, wv)

    # f32-MXU path: tight-ish check (approx reciprocal is the only deviation).
    out_f32 = jax.block_until_ready(
        head_forward(x, wk, wq, wv, compute_dtype=jnp.float32))
    assert out_f32.shape == (B, T, head_size)
    assert jnp.allclose(out_f32, ref, atol=1e-2, rtol=1e-2)

    # Default bf16-MXU / f32-accumulate path: looser check.
    out_bf16 = jax.block_until_ready(head_forward(x, wk, wq, wv))
    assert out_bf16.shape == (B, T, head_size)
    assert jnp.allclose(out_bf16, ref, atol=5e-2, rtol=5e-2)

    print("KERNEL_OK")
</pallas_src>

<mosaic_0001>
module attributes {stable_mosaic.version = 11 : i64} {
  func.func @_head_kernel(%arg0: i32, %arg1: memref<2x8x32xf32, #tpu.memory_space<vmem>>, %arg2: memref<32x48xf32, #tpu.memory_space<vmem>>, %arg3: memref<2x16x8xf32, #tpu.memory_space<vmem>>) attributes {dimension_semantics = [#tpu.dimension_semantics<parallel>], iteration_bounds = array<i64: 2>, scalar_prefetch = 0 : i64, scratch_operands = 0 : i64, tpu.core_type = #tpu.core_type<tc>, window_params = [{transform_indices = @transform_0, window_bounds = array<i64: 2, 8, 32>}, {pipeline_mode = #tpu.pipeline_mode<synchronous>, transform_indices = @transform_1, window_bounds = array<i64: 32, 48>}, {transform_indices = @transform_2, window_bounds = array<i64: 2, 16, 8>}]} {
    %c0 = arith.constant 0 : index
    %c0_0 = arith.constant 0 : index
    %c0_1 = arith.constant 0 : index
    %0 = vector.load %arg1[%c0, %c0_0, %c0_1] : memref<2x8x32xf32, #tpu.memory_space<vmem>>, vector<2x8x32xf32>
    %c0_2 = arith.constant 0 : index
    %c0_3 = arith.constant 0 : index
    %1 = vector.load %arg2[%c0_2, %c0_3] : memref<32x48xf32, #tpu.memory_space<vmem>>, vector<32x48xf32>
    %2 = vector.shape_cast %0 : vector<2x8x32xf32> to vector<16x32xf32>
    %cst = arith.constant dense<0.000000e+00> : vector<16x48xf32>
    %3 = tpu.matmul %2, %1, %cst {dimension_numbers = #tpu.dot_dimension_numbers<[1], [0], [0], [1], [0, 0, 1, 1], [], []>} : vector<16x32xf32>, vector<32x48xf32>, vector<16x48xf32> -> vector<16x48xf32>
    %4 = vector.shape_cast %3 : vector<16x48xf32> to vector<2x8x48xf32>
    %5 = vector.extract_strided_slice %4 {offsets = [0, 0, 0], sizes = [2, 8, 16], strides = [1, 1, 1]} : vector<2x8x48xf32> to vector<2x8x16xf32>
    %6 = vector.extract_strided_slice %4 {offsets = [0, 0, 16], sizes = [2, 8, 16], strides = [1, 1, 1]} : vector<2x8x48xf32> to vector<2x8x16xf32>
    %7 = vector.extract_strided_slice %4 {offsets = [0, 0, 32], sizes = [2, 8, 16], strides = [1, 1, 1]} : vector<2x8x48xf32> to vector<2x8x16xf32>
    %cst_4 = arith.constant 0.176776692 : f32
    %8 = vector.broadcast %cst_4 : f32 to vector<2x8x16xf32>
    %9 = arith.mulf %6, %8 : vector<2x8x16xf32>
    %cst_5 = arith.constant dense<0.000000e+00> : vector<2x8x8xf32>
    %10 = tpu.matmul %9, %5, %cst_5 {dimension_numbers = #tpu.dot_dimension_numbers<[2], [2], [1], [1], [0, 0, 0, 1, 1, 1], [0], [0]>} : vector<2x8x16xf32>, vector<2x8x16xf32>, vector<2x8x8xf32> -> vector<2x8x8xf32>
    %11 = tpu.iota {dimensions = array<i32: 1>} : vector<1x8x1xi32>
    %12 = tpu.iota {dimensions = array<i32: 2>} : vector<1x1x8xi32>
    %13 = vector.broadcast %12 : vector<1x1x8xi32> to vector<1x8x8xi32>
    %14 = vector.broadcast %11 : vector<1x8x1xi32> to vector<1x8x8xi32>
    %15 = arith.cmpi sle, %13, %14 : vector<1x8x8xi32>
    %cst_6 = arith.constant 0xFF800000 : f32
    %16 = vector.shape_cast %15 : vector<1x8x8xi1> to vector<1x8x8xi1>
    %17 = vector.broadcast %16 : vector<1x8x8xi1> to vector<2x8x8xi1>
    %18 = vector.broadcast %cst_6 : f32 to vector<2x8x8xf32>
    %19 = arith.select %17, %10, %18 : vector<2x8x8xi1>, vector<2x8x8xf32>
    %cst_7 = arith.constant dense<0xFF800000> : vector<2x8xf32>
    %20 = vector.multi_reduction <maximumf>, %19, %cst_7 [2] : vector<2x8x8xf32> to vector<2x8xf32>
    %21 = vector.shape_cast %20 : vector<2x8xf32> to vector<2x8x1xf32>
    %22 = vector.broadcast %21 : vector<2x8x1xf32> to vector<2x8x8xf32>
    %23 = arith.subf %19, %22 : vector<2x8x8xf32>
    %24 = math.exp %23 : vector<2x8x8xf32>
    %cst_8 = arith.constant dense<0.000000e+00> : vector<2x8xf32>
    %25 = vector.multi_reduction <add>, %24, %cst_8 [2] : vector<2x8x8xf32> to vector<2x8xf32>
    %cst_9 = arith.constant dense<0.000000e+00> : vector<2x16x8xf32>
    %26 = tpu.matmul %7, %24, %cst_9 {dimension_numbers = #tpu.dot_dimension_numbers<[1], [2], [2], [1], [0, 0, 0, 2, 1, 1], [0], [0]>} : vector<2x8x16xf32>, vector<2x8x8xf32>, vector<2x16x8xf32> -> vector<2x16x8xf32>
    %27 = tpu.reciprocal %25 {approx = true} : vector<2x8xf32> -> vector<2x8xf32>
    %28 = vector.shape_cast %27 : vector<2x8xf32> to vector<2x1x8xf32>
    %29 = vector.broadcast %28 : vector<2x1x8xf32> to vector<2x16x8xf32>
    %30 = arith.mulf %26, %29 : vector<2x16x8xf32>
    %c0_10 = arith.constant 0 : index
    %c0_11 = arith.constant 0 : index
    %c0_12 = arith.constant 0 : index
    %31 = vector.load %arg3[%c0_10, %c0_11, %c0_12] : memref<2x16x8xf32, #tpu.memory_space<vmem>>, vector<2x16x8xf32>
    tpu.vector_store %arg3[%c0_10, %c0_11, %c0_12], %30 {strides = array<i32>} : memref<2x16x8xf32, #tpu.memory_space<vmem>>, vector<2x16x8xf32>,
    return
  }
  func.func @transform_0(%arg0: i32) -> (i32, i32, i32) {
    %c0_i32 = arith.constant 0 : i32
    %c0_i32_0 = arith.constant 0 : i32
    %c0_i32_1 = arith.constant 0 : i32
    return %arg0, %c0_i32, %c0_i32_0 : i32, i32, i32
  }
  func.func @transform_1(%arg0: i32) -> (i32, i32) {
    %c0_i32 = arith.constant 0 : i32
    %c0_i32_0 = arith.constant 0 : i32
    %c0_i32_1 = arith.constant 0 : i32
    return %c0_i32, %c0_i32_0 : i32, i32
  }
  func.func @transform_2(%arg0: i32) -> (i32, i32, i32) {
    %c0_i32 = arith.constant 0 : i32
    %c0_i32_0 = arith.constant 0 : i32
    %c0_i32_1 = arith.constant 0 : i32
    return %arg0, %c0_i32, %c0_i32_0 : i32, i32, i32
  }
}

</mosaic_0001>

<llo_original>
// kernel: tpu_custom_call.1
$region0: #{tpu_custom_call.1}
  #allocation0 [shape = 'u32[]', space=smem, size = 0x4, offset = 0x4, fixed_abs, tag = 'smem constant byte address 0x4 - core index']
  #allocation1 [shape = 'u32[144,128]{1,0:T(1,128)}', space=vmem, size = 0x12000, scoped, tag = 'internal scratch']
  %s0 = inlined_call_operand.hbm [shape: f32[4,8,32], index: 0, kind: input, shape index: {}]
  %s1 = inlined_call_operand.hbm [shape: f32[32,48], index: 1, kind: input, shape index: {}]
  %s2 = inlined_call_operand.vmem [shape: f32[4,16,8], index: 2, kind: output, shape index: {}]
  %s3 = sld [smem:[#allocation0]]
  $region49: #{tpu_custom_call.1} parent=0
    _
  %s5 = ssub.s32 1, %s3
  %s6 = scalar_select 0, %s5, %s3
  $region1: #{tpu_custom_call.1} parent=0
    #allocation2 [shape = 'u8[16384]{0}', space=vmem, size = 0x4000, scoped, tag = 'input window, operand 0']
    #allocation3 [shape = 's32[2]{0}', space=sflag, size = 0x8, scoped, tag = 'scoped memory for tpu_custom_call.1']
    #allocation4 [shape = 'u8[16384]{0}', space=vmem, size = 0x4000, scoped, tag = 'input window, operand 1, single buffered']
    #allocation5 [shape = 's32[1]{0}', space=sflag, size = 0x4, scoped, tag = 'scoped memory for tpu_custom_call.1']
    %7 = vsyncpa [#allocation3], 0
    %s8 = scalar_lea.sflag [#allocation3], 1
    %9 = vsyncpa %s8, 0
    %10 = vsyncpa [#allocation5], 0
    loop: start=0, step=1, limit=4
    $region2: #{tpu_custom_call.1} parent=1 // loop_pre_header
      _
    $region3: #{tpu_custom_call.1} parent=1 // loop_header
      %s12 = sphi 0, %s16
      %p13 = scmp.ge.s32.totalorder %s12, 4
      %s22 = sphi 0, %s24
      %s25 = sphi 0, %s22
      %s26 = sphi 0, %s25
      %s42 = sphi 0, %s26
      %s46 = sphi 0, %s46
      %s48 = sphi 0, %s46
      %s49 = sphi 0, %s48
      %s63 = sphi 0, %s49
      %s69 = sphi 0, %s71
      %s72 = sphi 0, %s69
      %s73 = sphi 0, %s72
      %s89 = sphi 0, %s73
    $region4: #{tpu_custom_call.1} parent=1 // loop_header_branch
      %15 = sbr.rel (%p13) target = $region8
    $region5: #{tpu_custom_call.1} parent=1 // loop_body
      %s17 = ssub.s32 %s12, 1
      %s18 = ssub.s32 %s12, 2
      %s19 = sadd.s32 %s12, 1
      %s20 = ssub.s32 %s12, %s19
      %p21 = scmp.eq.s32.totalorder %s20, 0
      %s23 = sadd.s32 %s22, 1
      %s24 = scalar_select %p21, %s22, %s23
      %p27 = pneg %p21
      %p28 = scmp.eq.s32.totalorder %s12, 1
      %p29 = por %p27, %p28
      %p30 = scmp.ne.s32.totalorder %s22, %s25
      %p31 = scmp.eq.s32.totalorder %s12, 0
      %p32 = por %p30, %p31
      %p33 = scmp.ne.s32.totalorder %s22, %s25
      %p34 = scmp.eq.s32.totalorder %s17, 1
      %p35 = por %p33, %p34
      %p36 = scmp.ne.s32.totalorder %s25, %s26
      %p37 = scmp.eq.s32.totalorder %s17, 0
      %p38 = por %p36, %p37
      %p39 = scmp.ne.s32.totalorder %s25, %s26
      %p40 = scmp.eq.s32.totalorder %s18, 1
      %p41 = por %p39, %p40
      %p43 = scmp.ne.s32.totalorder %s26, %s42
      %p44 = scmp.eq.s32.totalorder %s18, 0
      %p45 = por %p43, %p44
      %s47 = sadd.s32 %s46, 1
      %p50 = scmp.eq.s32.totalorder %s12, 1
      %p51 = scmp.ne.s32.totalorder %s46, %s48
      %p52 = scmp.eq.s32.totalorder %s12, 0
      %p53 = por %p51, %p52
      %p54 = scmp.ne.s32.totalorder %s46, %s48
      %p55 = scmp.eq.s32.totalorder %s17, 1
      %p56 = por %p54, %p55
      %p57 = scmp.ne.s32.totalorder %s48, %s49
      %p58 = scmp.eq.s32.totalorder %s17, 0
      %p59 = por %p57, %p58
      %p60 = scmp.ne.s32.totalorder %s48, %s49
      %p61 = scmp.eq.s32.totalorder %s18, 1
      %p62 = por %p60, %p61
      %p64 = scmp.ne.s32.totalorder %s49, %s63
      %p65 = scmp.eq.s32.totalorder %s18, 0
      %p66 = por %p64, %p65
      %s67 = ssub.s32 %s12, %s19
      %p68 = scmp.eq.s32.totalorder %s67, 0
      %s70 = sadd.s32 %s69, 1
      %s71 = scalar_select %p68, %s69, %s70
      %p74 = pneg %p68
      %p75 = scmp.eq.s32.totalorder %s12, 1
      %p76 = por %p74, %p75
      %p77 = scmp.ne.s32.totalorder %s69, %s72
      %p78 = scmp.eq.s32.totalorder %s12, 0
      %p79 = por %p77, %p78
      %p80 = scmp.ne.s32.totalorder %s69, %s72
      %p81 = scmp.eq.s32.totalorder %s17, 1
      %p82 = por %p80, %p81
      %p83 = scmp.ne.s32.totalorder %s72, %s73
      %p84 = scmp.eq.s32.totalorder %s17, 0
      %p85 = por %p83, %p84
      %p86 = scmp.ne.s32.totalorder %s72, %s73
      %p87 = scmp.eq.s32.totalorder %s18, 1
      %p88 = por %p86, %p87
      %p90 = scmp.ne.s32.totalorder %s73, %s89
      %p91 = scmp.eq.s32.totalorder %s18, 0
      %p92 = por %p90, %p91
      %p93 = scmp.le.s32.totalorder 1, %s12
      %p94 = scmp.lt.s32.totalorder %s12, 3
      %p95 = pnand %p93, %p94
      %p96 = pneg %p95
      // Predicated region
      $region9: #{tpu_custom_call.1} parent=5 // pred_check
        _
      $region10: #{tpu_custom_call.1} parent=5 // pred_check_branch
        %98 = sbr.rel (%p95) target = $region12
      $region11: #{tpu_custom_call.1} parent=5 // pred_region
        %s99 = ssub.s32 %s12, 1
        // Predicated region
        $region13: #{tpu_custom_call.1} parent=11 // pred_check
          %p100 = pneg %p59
        $region14: #{tpu_custom_call.1} parent=11 // pred_check_branch
          %102 = sbr.rel (%p100) target = $region16
        $region15: #{tpu_custom_call.1} parent=11 // pred_region
          %s104 = ssub.s32 512, 512
          %105 = vsyncadd [#allocation5], %s104
          %s106 = sshll.u32 [#allocation4], 4
          %s107 = int_to_ptr.vmem [resolvable:$true] %s106
          %112 = dma.hbm_to_vmem [thread:$0]  %s1, 512, %s107, [#allocation5], 128, 128, 8
        $region16: #{tpu_custom_call.1} parent=11 // pred_fallthru
          _
      $region12: #{tpu_custom_call.1} parent=5 // pred_fallthru
        _
      %p113 = scmp.lt.s32.totalorder %s12, 2
      // Predicated region
      $region17: #{tpu_custom_call.1} parent=5 // pred_check
        %p114 = pneg %p113
      $region18: #{tpu_custom_call.1} parent=5 // pred_check_branch
        %116 = sbr.rel (%p114) target = $region20
      $region19: #{tpu_custom_call.1} parent=5 // pred_region
        // Predicated region
        $region21: #{tpu_custom_call.1} parent=19 // pred_check
          %p117 = pneg %p32
        $region22: #{tpu_custom_call.1} parent=19 // pred_check_branch
          %119 = sbr.rel (%p117) target = $region24
        $region23: #{tpu_custom_call.1} parent=19 // pred_region
          %s120 = sand.u32 %s22, 1
          %s121 = scalar_lea.sflag [#allocation3], %s120
          %s122 = sand.u32 %s22, 1
          %s123 = smul.addr %s122, 16
          %s124 = scalar_lea.vmem [#allocation2], %s123
          %s125 = smul.u32 2, %s12
          %s127 = ssub.s32 256, 256
          %128 = vsyncadd %s121, %s127
          %s129 = smul.addr %s125, 128
          %s130 = scalar_lea.hbm %s0, %s129
          %s131 = sshll.u32 %s124, 4
          %s132 = int_to_ptr.vmem [resolvable:$true] %s131
          %137 = dma.hbm_to_vmem [thread:$0]  %s130, 256, %s132, %s121, 128, 128, 8
        $region24: #{tpu_custom_call.1} parent=19 // pred_fallthru
          _
      $region20: #{tpu_custom_call.1} parent=5 // pred_fallthru
        _
      %p138 = scmp.le.s32.totalorder 1, %s12
      %p139 = scmp.lt.s32.totalorder %s12, 3
      %p140 = pnand %p138, %p139
      %p141 = pneg %p140
      // Predicated region
      $region25: #{tpu_custom_call.1} parent=5 // pred_check
        _
      $region26: #{tpu_custom_call.1} parent=5 // pred_check_branch
        %143 = sbr.rel (%p140) target = $region28
      $region27: #{tpu_custom_call.1} parent=5 // pred_region
        %s144 = ssub.s32 %s12, 1
        %s145 = sand.u32 %s25, 1
        %s146 = scalar_lea.sflag [#allocation3], %s145
        %s147 = sand.u32 %s25, 1
        %s148 = smul.addr %s147, 16
        %s149 = scalar_lea.vmem [#allocation2], %s148
        // Predicated region
        $region29: #{tpu_custom_call.1} parent=27 // pred_check
          %p150 = pneg %p38
        $region30: #{tpu_custom_call.1} parent=27 // pred_check_branch
          %152 = sbr.rel (%p150) target = $region32
        $region31: #{tpu_custom_call.1} parent=27 // pred_region
          %153 = dma.done %s146, 256
        $region32: #{tpu_custom_call.1} parent=27 // pred_fallthru
          _
        // Predicated region
        $region33: #{tpu_custom_call.1} parent=27 // pred_check
          %p154 = pneg %p59
        $region34: #{tpu_custom_call.1} parent=27 // pred_check_branch
          %156 = sbr.rel (%p154) target = $region36
        $region35: #{tpu_custom_call.1} parent=27 // pred_region
          %157 = dma.done [#allocation5], 512
        $region36: #{tpu_custom_call.1} parent=27 // pred_fallthru
          _
        %s158 = sand.u32 %s25, 1
        %s159 = scalar_lea.sflag [#allocation3], %s158
        %s160 = sand.u32 %s25, 1
        %s161 = smul.addr %s160, 16
        %s162 = scalar_lea.vmem [#allocation2], %s161
        %p163 = pneg %p38
        %p164 = pneg %p35
        %p165 = pneg %p59
        %p166 = pneg %p56
        %p167 = pneg %p85
        %p168 = pneg %p82
        %s169 = smul.u32 2, %s17
        %p170 = scmp.lt.s32.totalorder %s169, 3
        %s171 = scalar_select %p170, %s169, 3
        %s172 = smul.addr %s171, 2
        %s173 = smul.addr %s172, 8
        %s174 = scalar_lea.vmem %s2, %s173
        %s175 = smul.u32 2, %s17
        %s176 = smul.u32 2, %s17
        %p177 = scmp.lt.s32.totalorder %s176, 3
        %s178 = scalar_select %p177, %s176, 3
        %s179 = smul.addr %s178, 2
        %s180 = smul.addr %s179, 8
        %s181 = scalar_lea.vmem %s2, %s180
        %s182 = smul.u32 2, %s17
        %v183 = vld [vmem:[%s149] sm:$0xff]
        %v184 = vld [vmem:[%s149 + $0x8] sm:$0xff]
        %v185 = vld [vmem:[#allocation4] sm:$0xff]
        %v186 = vld [vmem:[#allocation4 + $0x8] sm:$0xff]
        %v187 = vld [vmem:[#allocation4 + $0x10] sm:$0xff]
        %v188 = vld [vmem:[#allocation4 + $0x18] sm:$0xff]
        %vm189 = vcmask 261120
        %v191 = vsel %vm189, %v183, 0
        %v194 = vsel %vm189, %v184, 0
        %196 = vmatprep.subr.mxu0 0.0
        %197 = vmatpush1.msra.mxu0 %v185
        %198 = vmatprep.subr.mxu0 0.0
        %199 = vmatpush1.msra.mxu0 %v186
        %200 = vmatprep.subr.mxu0 0.0
        %201 = vmatpush1.msra.mxu0 %v187
        %202 = vmatprep.subr.mxu0 0.0
        %203 = vmatpush1.msra.mxu0 %v188
        %204 = vmatprep.subr.mxu0 0.0
        %205 = vmatpush1.msra.mxu0 0.0
        %206 = vmatprep.subr.mxu0 0.0
        %207 = vmatpush1.msra.mxu0 0.0
        %208 = vmatprep.subr.mxu0 0.0
        %209 = vmatpush1.msra.mxu0 0.0
        %210 = vmatprep.subr.mxu0 0.0
        %211 = vmatpush1.msra.mxu0 0.0
        %212 = vmatprep.subr.mxu0 0.0
        %213 = vmatpush1.msra.mxu0 0.0
        %214 = vmatprep.subr.mxu0 0.0
        %215 = vmatpush1.msra.mxu0 0.0
        %216 = vmatprep.subr.mxu0 0.0
        %217 = vmatpush1.msra.mxu0 0.0
        %218 = vmatprep.subr.mxu0 0.0
        %219 = vmatpush1.msra.mxu0 0.0
        %220 = vmatprep.subr.mxu0 0.0
        %221 = vmatpush1.msra.mxu0 0.0
        %222 = vmatprep.subr.mxu0 0.0
        %223 = vmatpush1.msra.mxu0 0.0
        %224 = vmatprep.subr.mxu0 0.0
        %225 = vmatpush1.msra.mxu0 0.0
        %226 = vmatprep.subr.mxu0 0.0
        %227 = vmatpush1.msra.mxu0 0.0
        %228 = vmatprep.subr.mxu0 0.0
        %229 = vmatpush1.msra.mxu0 0.0
        %230 = vmatprep.subr.mxu0 0.0
        %231 = vmatpush1.msra.mxu0 0.0
        %232 = vmatprep.subr.mxu0 0.0
        %233 = vmatpush1.msra.mxu0 0.0
        %234 = vmatprep.subr.mxu0 0.0
        %235 = vmatpush1.msra.mxu0 0.0
        %236 = vmatprep.subr.mxu0 0.0
        %237 = vmatpush1.msra.mxu0 0.0
        %238 = vmatprep.subr.mxu0 0.0
        %239 = vmatpush1.msra.mxu0 0.0
        %240 = vmatprep.subr.mxu0 0.0
        %241 = vmatpush1.msra.mxu0 0.0
        %242 = vmatprep.subr.mxu0 0.0
        %243 = vmatpush1.msra.mxu0 0.0
        %244 = vmatprep.subr.mxu0 0.0
        %245 = vmatpush1.msra.mxu0 0.0
        %246 = vmatprep.subr.mxu0 0.0
        %247 = vmatpush1.msra.mxu0 0.0
        %248 = vmatprep.subr.mxu0 0.0
        %249 = vmatpush1.msra.mxu0 0.0
        %250 = vmatprep.subr.mxu0 0.0
        %251 = vmatpush1.msra.mxu0 0.0
        %252 = vmatprep.subr.mxu0 0.0
        %253 = vmatpush1.msra.mxu0 0.0
        %254 = vmatprep.subr.mxu0 0.0
        %255 = vmatpush1.msra.mxu0 0.0
        %256 = vmatprep.subr.mxu0 0.0
        %257 = vmatpush1.msra.mxu0 0.0
        %258 = vmatprep.subr.mxu0 0.0
        %259 = vmatpush1.msra.mxu0 0.0
        %260 = vmatprep.mubr.f32.mxu0 0.0
        %261 = vmatmul.mubr.f32.gmra.mrb[0].mxu0 %v191
        %v262 = vpop.f32.mrb[0].mxu0
        %v263 = vadd.f32 0.0, %v262
        %v264 = vpop.f32.mrb[0].mxu0
        %265 = vmatprep.mubr.f32.mxu0 0.0
        %266 = vmatmul.mubr.f32.gmra.mrb[0].mxu0 %v194
        %v267 = vpop.f32.mrb[0].mxu0
        %v268 = vadd.f32 0.0, %v267
        %v269 = vpop.f32.mrb[0].mxu0
        %270 = vdwg.mxu0
        %v271 = vmul.f32 %v263, 0.17677669
        %v272 = vmul.f32 %v268, 0.17677669
        %274 = vrot.lane.b32.xlu0 %v271, 112
        %v275 = vpop.permute.xlu0 %274
        %vm276 = vcmask 130048
        %v277 = vsel %vm276, %v275, 0
        %v280 = vsel %vm276, %v263, 0
        %282 = vmatprep.subr.mxu0 0.0
        %283 = vmatpush1.xpose.msra.mxu0 %v280
        %284 = vmatprep.subr.mxu0 0.0
        %285 = vmatpush1.xpose.msra.mxu0 0.0
        %286 = vmatprep.subr.mxu0 0.0
        %287 = vmatpush1.xpose.msra.mxu0 0.0
        %288 = vmatprep.subr.mxu0 0.0
        %289 = vmatpush1.xpose.msra.mxu0 0.0
        %290 = vmatprep.subr.mxu0 0.0
        %291 = vmatpush1.xpose.msra.mxu0 0.0
        %292 = vmatprep.subr.mxu0 0.0
        %293 = vmatpush1.xpose.msra.mxu0 0.0
        %294 = vmatprep.subr.mxu0 0.0
        %295 = vmatpush1.xpose.msra.mxu0 0.0
        %296 = vmatprep.subr.mxu0 0.0
        %297 = vmatpush1.xpose.msra.mxu0 0.0
        %298 = vmatprep.subr.mxu0 0.0
        %299 = vmatpush1.xpose.msra.mxu0 0.0
        %300 = vmatprep.subr.mxu0 0.0
        %301 = vmatpush1.xpose.msra.mxu0 0.0
        %302 = vmatprep.subr.mxu0 0.0
        %303 = vmatpush1.xpose.msra.mxu0 0.0
        %304 = vmatprep.subr.mxu0 0.0
        %305 = vmatpush1.xpose.msra.mxu0 0.0
        %306 = vmatprep.subr.mxu0 0.0
        %307 = vmatpush1.xpose.msra.mxu0 0.0
        %308 = vmatprep.subr.mxu0 0.0
        %309 = vmatpush1.xpose.msra.mxu0 0.0
        %310 = vmatprep.subr.mxu0 0.0
        %311 = vmatpush1.xpose.msra.mxu0 0.0
        %312 = vmatprep.subr.mxu0 0.0
        %313 = vmatpush1.xpose.msra.mxu0 0.0
        %314 = vmatprep.subr.mxu0 0.0
        %315 = vmatpush1.xpose.msra.mxu0 0.0
        %316 = vmatprep.subr.mxu0 0.0
        %317 = vmatpush1.xpose.msra.mxu0 0.0
        %318 = vmatprep.subr.mxu0 0.0
        %319 = vmatpush1.xpose.msra.mxu0 0.0
        %320 = vmatprep.subr.mxu0 0.0
        %321 = vmatpush1.xpose.msra.mxu0 0.0
        %322 = vmatprep.subr.mxu0 0.0
        %323 = vmatpush1.xpose.msra.mxu0 0.0
        %324 = vmatprep.subr.mxu0 0.0
        %325 = vmatpush1.xpose.msra.mxu0 0.0
        %326 = vmatprep.subr.mxu0 0.0
        %327 = vmatpush1.xpose.msra.mxu0 0.0
        %328 = vmatprep.subr.mxu0 0.0
        %329 = vmatpush1.xpose.msra.mxu0 0.0
        %330 = vmatprep.subr.mxu0 0.0
        %331 = vmatpush1.xpose.msra.mxu0 0.0
        %332 = vmatprep.subr.mxu0 0.0
        %333 = vmatpush1.xpose.msra.mxu0 0.0
        %334 = vmatprep.subr.mxu0 0.0
        %335 = vmatpush1.xpose.msra.mxu0 0.0
        %336 = vmatprep.subr.mxu0 0.0
        %337 = vmatpush1.xpose.msra.mxu0 0.0
        %338 = vmatprep.subr.mxu0 0.0
        %339 = vmatpush1.xpose.msra.mxu0 0.0
        %340 = vmatprep.subr.mxu0 0.0
        %341 = vmatpush1.xpose.msra.mxu0 0.0
        %342 = vmatprep.subr.mxu0 0.0
        %343 = vmatpush1.xpose.msra.mxu0 0.0
        %344 = vmatprep.subr.mxu0 0.0
        %345 = vmatpush1.xpose.msra.mxu0 0.0
        %346 = vmatprep.mubr.f32.mxu0 0.0
        %347 = vmatmul.mubr.f32.gmra.mrb[0].mxu0 %v277
        %v348 = vpop.f32.mrb[0].mxu0
        %v349 = vadd.f32 0.0, %v348
        %v350 = vpop.f32.mrb[0].mxu0
        %351 = vdwg.mxu0
        %353 = vrot.lane.b32.xlu0 %v272, 112
        %v354 = vpop.permute.xlu0 %353
        %v355 = vsel %vm276, %v354, 0
        %v358 = vsel %vm276, %v268, 0
        %360 = vmatprep.subr.mxu0 0.0
        %361 = vmatpush1.xpose.msra.mxu0 %v358
        %362 = vmatprep.subr.mxu0 0.0
        %363 = vmatpush1.xpose.msra.mxu0 0.0
        %364 = vmatprep.subr.mxu0 0.0
        %365 = vmatpush1.xpose.msra.mxu0 0.0
        %366 = vmatprep.subr.mxu0 0.0
        %367 = vmatpush1.xpose.msra.mxu0 0.0
        %368 = vmatprep.subr.mxu0 0.0
        %369 = vmatpush1.xpose.msra.mxu0 0.0
        %370 = vmatprep.subr.mxu0 0.0
        %371 = vmatpush1.xpose.msra.mxu0 0.0
        %372 = vmatprep.subr.mxu0 0.0
        %373 = vmatpush1.xpose.msra.mxu0 0.0
        %374 = vmatprep.subr.mxu0 0.0
        %375 = vmatpush1.xpose.msra.mxu0 0.0
        %376 = vmatprep.subr.mxu0 0.0
        %377 = vmatpush1.xpose.msra.mxu0 0.0
        %378 = vmatprep.subr.mxu0 0.0
        %379 = vmatpush1.xpose.msra.mxu0 0.0
        %380 = vmatprep.subr.mxu0 0.0
        %381 = vmatpush1.xpose.msra.mxu0 0.0
        %382 = vmatprep.subr.mxu0 0.0
        %383 = vmatpush1.xpose.msra.mxu0 0.0
        %384 = vmatprep.subr.mxu0 0.0
        %385 = vmatpush1.xpose.msra.mxu0 0.0
        %386 = vmatprep.subr.mxu0 0.0
        %387 = vmatpush1.xpose.msra.mxu0 0.0
        %388 = vmatprep.subr.mxu0 0.0
        %389 = vmatpush1.xpose.msra.mxu0 0.0
        %390 = vmatprep.subr.mxu0 0.0
        %391 = vmatpush1.xpose.msra.mxu0 0.0
        %392 = vmatprep.subr.mxu0 0.0
        %393 = vmatpush1.xpose.msra.mxu0 0.0
        %394 = vmatprep.subr.mxu0 0.0
        %395 = vmatpush1.xpose.msra.mxu0 0.0
        %396 = vmatprep.subr.mxu0 0.0
        %397 = vmatpush1.xpose.msra.mxu0 0.0
        %398 = vmatprep.subr.mxu0 0.0
        %399 = vmatpush1.xpose.msra.mxu0 0.0
        %400 = vmatprep.subr.mxu0 0.0
        %401 = vmatpush1.xpose.msra.mxu0 0.0
        %402 = vmatprep.subr.mxu0 0.0
        %403 = vmatpush1.xpose.msra.mxu0 0.0
        %404 = vmatprep.subr.mxu0 0.0
        %405 = vmatpush1.xpose.msra.mxu0 0.0
        %406 = vmatprep.subr.mxu0 0.0
        %407 = vmatpush1.xpose.msra.mxu0 0.0
        %408 = vmatprep.subr.mxu0 0.0
        %409 = vmatpush1.xpose.msra.mxu0 0.0
        %410 = vmatprep.subr.mxu0 0.0
        %411 = vmatpush1.xpose.msra.mxu0 0.0
        %412 = vmatprep.subr.mxu0 0.0
        %413 = vmatpush1.xpose.msra.mxu0 0.0
        %414 = vmatprep.subr.mxu0 0.0
        %415 = vmatpush1.xpose.msra.mxu0 0.0
        %416 = vmatprep.subr.mxu0 0.0
        %417 = vmatpush1.xpose.msra.mxu0 0.0
        %418 = vmatprep.subr.mxu0 0.0
        %419 = vmatpush1.xpose.msra.mxu0 0.0
        %420 = vmatprep.subr.mxu0 0.0
        %421 = vmatpush1.xpose.msra.mxu0 0.0
        %422 = vmatprep.subr.mxu0 0.0
        %423 = vmatpush1.xpose.msra.mxu0 0.0
        %424 = vmatprep.mubr.f32.mxu0 0.0
        %425 = vmatmul.mubr.f32.gmra.mrb[0].mxu0 %v355
        %v426 = vpop.f32.mrb[0].mxu0
        %v427 = vadd.f32 0.0, %v426
        %v428 = vpop.f32.mrb[0].mxu0
        %429 = vdwg.mxu0
        %v430 = vlaneseq
        %v431 = vshrl.u32 %v430, 7
        %v432 = vlaneseq
        %v433 = vand.u32 %v432, 127
        %vm434 = vcmp.le.s32.totalorder %v433, %v431
        %v435 = vsel %vm434, 1, 0
        %vm436 = vcmp.eq.s32.totalorder %v435, 1
        %v437 = vsel %vm436, %v349, -inf
        %v438 = vsel %vm436, %v427, -inf
        %vm439 = vcmask 64512
        %v440 = vsel %vm439, %v437, -inf
        %441 = vmax.xlane.f32.xlu0 %v440
        %v442 = vpop.xlane.xlu0 %441
        %v443 = vsel %vm439, %v438, -inf
        %444 = vmax.xlane.f32.xlu0 %v443
        %v445 = vpop.xlane.xlu0 %444
        %v446 = vsub.f32 %v437, %v442
        %v447 = vsub.f32 %v438, %v445
        %v448 = vmul.f32 %v446, 1.442695
        %v449 = vpow.pop %v448
        %v450 = vmul.f32 %v447, 1.442695
        %v451 = vpow.pop %v450
        %v452 = vsel %vm439, %v449, 0.0
        %453 = vadd.xlane.f32.xlu0 %v452
        %v454 = vpop.xlane.xlu0 %453
        %v455 = vsel %vm439, %v451, 0.0
        %456 = vadd.xlane.f32.xlu0 %v455
        %v457 = vpop.xlane.xlu0 %456
        %458 = vrot.lane.b32.xlu0 %v263, 96
        %v459 = vpop.permute.xlu0 %458
        %461 = vxpose.xlu0.b32.start [1/16] %v459, 128
        %462 = vxpose.xlu0.b32.cont [2/16] 0.0, 128
        %463 = vxpose.xlu0.b32.cont [3/16] 0.0, 128
        %464 = vxpose.xlu0.b32.cont [4/16] 0.0, 128
        %465 = vxpose.xlu0.b32.cont [5/16] 0.0, 128
        %466 = vxpose.xlu0.b32.cont [6/16] 0.0, 128
        %467 = vxpose.xlu0.b32.cont [7/16] 0.0, 128
        %468 = vxpose.xlu0.b32.cont [8/16] 0.0, 128
        %469 = vxpose.xlu0.b32.cont [9/16] 0.0, 128
        %470 = vxpose.xlu0.b32.cont [10/16] 0.0, 128
        %471 = vxpose.xlu0.b32.cont [11/16] 0.0, 128
        %472 = vxpose.xlu0.b32.cont [12/16] 0.0, 128
        %473 = vxpose.xlu0.b32.cont [13/16] 0.0, 128
        %474 = vxpose.xlu0.b32.cont [14/16] 0.0, 128
        %475 = vxpose.xlu0.b32.cont [15/16] 0.0, 128
        %476 = vxpose.xlu0.b32.end [16/16] 0.0, 128
        %v477 = vpop.trf.xlu0
        %v478 = vpop.trf.xlu0
        %v479 = vpop.trf.xlu0
        %v480 = vpop.trf.xlu0
        %v481 = vpop.trf.xlu0
        %v482 = vpop.trf.xlu0
        %v483 = vpop.trf.xlu0
        %v484 = vpop.trf.xlu0
        %v485 = vpop.trf.xlu0
        %v486 = vpop.trf.xlu0
        %v487 = vpop.trf.xlu0
        %v488 = vpop.trf.xlu0
        %v489 = vpop.trf.xlu0
        %v490 = vpop.trf.xlu0
        %v491 = vpop.trf.xlu0
        %v492 = vpop.trf.xlu0
        %v494 = vsel %vm439, %v477, 0
        %v497 = vsel %vm439, %v478, 0
        %v500 = vsel %vm439, %v449, 0
        %502 = vmatprep.subr.mxu0 0.0
        %503 = vmatpush1.xpose.msra.mxu0 %v500
        %504 = vmatprep.subr.mxu0 0.0
        %505 = vmatpush1.xpose.msra.mxu0 0.0
        %506 = vmatprep.subr.mxu0 0.0
        %507 = vmatpush1.xpose.msra.mxu0 0.0
        %508 = vmatprep.subr.mxu0 0.0
        %509 = vmatpush1.xpose.msra.mxu0 0.0
        %510 = vmatprep.subr.mxu0 0.0
        %511 = vmatpush1.xpose.msra.mxu0 0.0
        %512 = vmatprep.subr.mxu0 0.0
        %513 = vmatpush1.xpose.msra.mxu0 0.0
        %514 = vmatprep.subr.mxu0 0.0
        %515 = vmatpush1.xpose.msra.mxu0 0.0
        %516 = vmatprep.subr.mxu0 0.0
        %517 = vmatpush1.xpose.msra.mxu0 0.0
        %518 = vmatprep.subr.mxu0 0.0
        %519 = vmatpush1.xpose.msra.mxu0 0.0
        %520 = vmatprep.subr.mxu0 0.0
        %521 = vmatpush1.xpose.msra.mxu0 0.0
        %522 = vmatprep.subr.mxu0 0.0
        %523 = vmatpush1.xpose.msra.mxu0 0.0
        %524 = vmatprep.subr.mxu0 0.0
        %525 = vmatpush1.xpose.msra.mxu0 0.0
        %526 = vmatprep.subr.mxu0 0.0
        %527 = vmatpush1.xpose.msra.mxu0 0.0
        %528 = vmatprep.subr.mxu0 0.0
        %529 = vmatpush1.xpose.msra.mxu0 0.0
        %530 = vmatprep.subr.mxu0 0.0
        %531 = vmatpush1.xpose.msra.mxu0 0.0
        %532 = vmatprep.subr.mxu0 0.0
        %533 = vmatpush1.xpose.msra.mxu0 0.0
        %534 = vmatprep.subr.mxu0 0.0
        %535 = vmatpush1.xpose.msra.mxu0 0.0
        %536 = vmatprep.subr.mxu0 0.0
        %537 = vmatpush1.xpose.msra.mxu0 0.0
        %538 = vmatprep.subr.mxu0 0.0
        %539 = vmatpush1.xpose.msra.mxu0 0.0
        %540 = vmatprep.subr.mxu0 0.0
        %541 = vmatpush1.xpose.msra.mxu0 0.0
        %542 = vmatprep.subr.mxu0 0.0
        %543 = vmatpush1.xpose.msra.mxu0 0.0
        %544 = vmatprep.subr.mxu0 0.0
        %545 = vmatpush1.xpose.msra.mxu0 0.0
        %546 = vmatprep.subr.mxu0 0.0
        %547 = vmatpush1.xpose.msra.mxu0 0.0
        %548 = vmatprep.subr.mxu0 0.0
        %549 = vmatpush1.xpose.msra.mxu0 0.0
        %550 = vmatprep.subr.mxu0 0.0
        %551 = vmatpush1.xpose.msra.mxu0 0.0
        %552 = vmatprep.subr.mxu0 0.0
        %553 = vmatpush1.xpose.msra.mxu0 0.0
        %554 = vmatprep.subr.mxu0 0.0
        %555 = vmatpush1.xpose.msra.mxu0 0.0
        %556 = vmatprep.subr.mxu0 0.0
        %557 = vmatpush1.xpose.msra.mxu0 0.0
        %558 = vmatprep.subr.mxu0 0.0
        %559 = vmatpush1.xpose.msra.mxu0 0.0
        %560 = vmatprep.subr.mxu0 0.0
        %561 = vmatpush1.xpose.msra.mxu0 0.0
        %562 = vmatprep.subr.mxu0 0.0
        %563 = vmatpush1.xpose.msra.mxu0 0.0
        %564 = vmatprep.subr.mxu0 0.0
        %565 = vmatpush1.xpose.msra.mxu0 0.0
        %566 = vmatprep.mubr.f32.mxu0 0.0
        %567 = vmatmul.mubr.f32.gmra.mrb[0].mxu0 %v494
        %v568 = vpop.f32.mrb[0].mxu0
        %v569 = vadd.f32 0.0, %v568
        %v570 = vpop.f32.mrb[0].mxu0
        %571 = vmatprep.mubr.f32.mxu0 0.0
        %572 = vmatmul.mubr.f32.gmra.mrb[0].mxu0 %v497
        %v573 = vpop.f32.mrb[0].mxu0
        %v574 = vadd.f32 0.0, %v573
        %v575 = vpop.f32.mrb[0].mxu0
        %576 = vdwg.mxu0
        %577 = vrot.lane.b32.xlu0 %v268, 96
        %v578 = vpop.permute.xlu0 %577
        %580 = vxpose.xlu0.b32.start [1/16] %v578, 128
        %581 = vxpose.xlu0.b32.cont [2/16] 0.0, 128
        %582 = vxpose.xlu0.b32.cont [3/16] 0.0, 128
        %583 = vxpose.xlu0.b32.cont [4/16] 0.0, 128
        %584 = vxpose.xlu0.b32.cont [5/16] 0.0, 128
        %585 = vxpose.xlu0.b32.cont [6/16] 0.0, 128
        %586 = vxpose.xlu0.b32.cont [7/16] 0.0, 128
        %587 = vxpose.xlu0.b32.cont [8/16] 0.0, 128
        %588 = vxpose.xlu0.b32.cont [9/16] 0.0, 128
        %589 = vxpose.xlu0.b32.cont [10/16] 0.0, 128
        %590 = vxpose.xlu0.b32.cont [11/16] 0.0, 128
        %591 = vxpose.xlu0.b32.cont [12/16] 0.0, 128
        %592 = vxpose.xlu0.b32.cont [13/16] 0.0, 128
        %593 = vxpose.xlu0.b32.cont [14/16] 0.0, 128
        %594 = vxpose.xlu0.b32.cont [15/16] 0.0, 128
        %595 = vxpose.xlu0.b32.end [16/16] 0.0, 128
        %v596 = vpop.trf.xlu0
        %v597 = vpop.trf.xlu0
        %v598 = vpop.trf.xlu0
        %v599 = vpop.trf.xlu0
        %v600 = vpop.trf.xlu0
        %v601 = vpop.trf.xlu0
        %v602 = vpop.trf.xlu0
        %v603 = vpop.trf.xlu0
        %v604 = vpop.trf.xlu0
        %v605 = vpop.trf.xlu0
        %v606 = vpop.trf.xlu0
        %v607 = vpop.trf.xlu0
        %v608 = vpop.trf.xlu0
        %v609 = vpop.trf.xlu0
        %v610 = vpop.trf.xlu0
        %v611 = vpop.trf.xlu0
        %v613 = vsel %vm439, %v596, 0
        %v616 = vsel %vm439, %v597, 0
        %v619 = vsel %vm439, %v451, 0
        %621 = vmatprep.subr.mxu0 0.0
        %622 = vmatpush1.xpose.msra.mxu0 %v619
        %623 = vmatprep.subr.mxu0 0.0
        %624 = vmatpush1.xpose.msra.mxu0 0.0
        %625 = vmatprep.subr.mxu0 0.0
        %626 = vmatpush1.xpose.msra.mxu0 0.0
        %627 = vmatprep.subr.mxu0 0.0
        %628 = vmatpush1.xpose.msra.mxu0 0.0
        %629 = vmatprep.subr.mxu0 0.0
        %630 = vmatpush1.xpose.msra.mxu0 0.0
        %631 = vmatprep.subr.mxu0 0.0
        %632 = vmatpush1.xpose.msra.mxu0 0.0
        %633 = vmatprep.subr.mxu0 0.0
        %634 = vmatpush1.xpose.msra.mxu0 0.0
        %635 = vmatprep.subr.mxu0 0.0
        %636 = vmatpush1.xpose.msra.mxu0 0.0
        %637 = vmatprep.subr.mxu0 0.0
        %638 = vmatpush1.xpose.msra.mxu0 0.0
        %639 = vmatprep.subr.mxu0 0.0
        %640 = vmatpush1.xpose.msra.mxu0 0.0
        %641 = vmatprep.subr.mxu0 0.0
        %642 = vmatpush1.xpose.msra.mxu0 0.0
        %643 = vmatprep.subr.mxu0 0.0
        %644 = vmatpush1.xpose.msra.mxu0 0.0
        %645 = vmatprep.subr.mxu0 0.0
        %646 = vmatpush1.xpose.msra.mxu0 0.0
        %647 = vmatprep.subr.mxu0 0.0
        %648 = vmatpush1.xpose.msra.mxu0 0.0
        %649 = vmatprep.subr.mxu0 0.0
        %650 = vmatpush1.xpose.msra.mxu0 0.0
        %651 = vmatprep.subr.mxu0 0.0
        %652 = vmatpush1.xpose.msra.mxu0 0.0
        %653 = vmatprep.subr.mxu0 0.0
        %654 = vmatpush1.xpose.msra.mxu0 0.0
        %655 = vmatprep.subr.mxu0 0.0
        %656 = vmatpush1.xpose.msra.mxu0 0.0
        %657 = vmatprep.subr.mxu0 0.0
        %658 = vmatpush1.xpose.msra.mxu0 0.0
        %659 = vmatprep.subr.mxu0 0.0
        %660 = vmatpush1.xpose.msra.mxu0 0.0
        %661 = vmatprep.subr.mxu0 0.0
        %662 = vmatpush1.xpose.msra.mxu0 0.0
        %663 = vmatprep.subr.mxu0 0.0
        %664 = vmatpush1.xpose.msra.mxu0 0.0
        %665 = vmatprep.subr.mxu0 0.0
        %666 = vmatpush1.xpose.msra.mxu0 0.0
        %667 = vmatprep.subr.mxu0 0.0
        %668 = vmatpush1.xpose.msra.mxu0 0.0
        %669 = vmatprep.subr.mxu0 0.0
        %670 = vmatpush1.xpose.msra.mxu0 0.0
        %671 = vmatprep.subr.mxu0 0.0
        %672 = vmatpush1.xpose.msra.mxu0 0.0
        %673 = vmatprep.subr.mxu0 0.0
        %674 = vmatpush1.xpose.msra.mxu0 0.0
        %675 = vmatprep.subr.mxu0 0.0
        %676 = vmatpush1.xpose.msra.mxu0 0.0
        %677 = vmatprep.subr.mxu0 0.0
        %678 = vmatpush1.xpose.msra.mxu0 0.0
        %679 = vmatprep.subr.mxu0 0.0
        %680 = vmatpush1.xpose.msra.mxu0 0.0
        %681 = vmatprep.subr.mxu0 0.0
        %682 = vmatpush1.xpose.msra.mxu0 0.0
        %683 = vmatprep.subr.mxu0 0.0
        %684 = vmatpush1.xpose.msra.mxu0 0.0
        %685 = vmatprep.mubr.f32.mxu0 0.0
        %686 = vmatmul.mubr.f32.gmra.mrb[0].mxu0 %v613
        %v687 = vpop.f32.mrb[0].mxu0
        %v688 = vadd.f32 0.0, %v687
        %v689 = vpop.f32.mrb[0].mxu0
        %690 = vmatprep.mubr.f32.mxu0 0.0
        %691 = vmatmul.mubr.f32.gmra.mrb[0].mxu0 %v616
        %v692 = vpop.f32.mrb[0].mxu0
        %v693 = vadd.f32 0.0, %v692
        %v694 = vpop.f32.mrb[0].mxu0
        %695 = vdwg.mxu0
        %v696 = vrcp.pop %v454
        %v697 = vrcp.pop %v457
        %v700 = vlaneseq
        %v701 = vshrl.u32 %v700, 7
        %v702 = vsub.s32 %v433, %v701
        %v703 = vrot.slane %v696, %v702
        %v704 = vlaneseq
        %v705 = vshrl.u32 %v704, 7
        %v706 = vsub.s32 %v433, %v705
        %v707 = vrot.slane %v697, %v706
        %vm708 = vcmask 1042434
        %v709 = vsel %vm708, %v703, %v703
        %vm710 = vcmask 1043459
        %v711 = vsel %vm710, %v703, %v709
        %vm712 = vcmask 1044484
        %v713 = vsel %vm712, %v703, %v711
        %vm714 = vcmask 1045509
        %v715 = vsel %vm714, %v703, %v713
        %vm716 = vcmask 1046534
        %v717 = vsel %vm716, %v703, %v715
        %vm718 = vcmask 1047559
        %v719 = vsel %vm718, %v703, %v717
        %v720 = vsel %vm708, %v707, %v707
        %v721 = vsel %vm710, %v707, %v720
        %v722 = vsel %vm712, %v707, %v721
        %v723 = vsel %vm714, %v707, %v722
        %v724 = vsel %vm716, %v707, %v723
        %v725 = vsel %vm718, %v707, %v724
        %v728 = vmul.f32 %v569, %v719
        %v729 = vmul.f32 %v574, %v719
        %v730 = vmul.f32 %v688, %v725
        %v731 = vmul.f32 %v693, %v725
        %732 = vst.msk [vmem:[%s181] sm:$0xff] %vm439, %v728
        %733 = vst.msk [vmem:[%s181 + $0x8] sm:$0xff] %vm439, %v729
        %734 = vst.msk [vmem:[%s181 + $0x10] sm:$0xff] %vm439, %v730
        %735 = vst.msk [vmem:[%s181 + $0x18] sm:$0xff] %vm439, %v731
        %s736 = smul.u32 2, %s17
        %p737 = scmp.lt.s32.totalorder %s736, 3
        %s738 = scalar_select %p737, %s736, 3
        %s739 = smul.addr %s738, 2
        %s740 = smul.addr %s739, 8
        %s741 = scalar_lea.vmem %s2, %s740
        // Predicated region
        $region37: #{tpu_custom_call.1} parent=27 // pred_check
          %p742 = pneg %p82
        $region38: #{tpu_custom_call.1} parent=27 // pred_check_branch
          %744 = sbr.rel (%p742) target = $region40
        $region39: #{tpu_custom_call.1} parent=27 // pred_region
          %s745 = smul.u32 2, %s17
        $region40: #{tpu_custom_call.1} parent=27 // pred_fallthru
          _
      $region28: #{tpu_custom_call.1} parent=5 // pred_fallthru
        _
      %p746 = scmp.le.s32.totalorder 2, %s12
      // Predicated region
      $region41: #{tpu_custom_call.1} parent=5 // pred_check
        %p747 = pneg %p746
      $region42: #{tpu_custom_call.1} parent=5 // pred_check_branch
        %749 = sbr.rel (%p747) target = $region44
      $region43: #{tpu_custom_call.1} parent=5 // pred_region
        %s750 = ssub.s32 %s12, 2
        // Predicated region
        $region45: #{tpu_custom_call.1} parent=43 // pred_check
          %p751 = pneg %p88
        $region46: #{tpu_custom_call.1} parent=43 // pred_check_branch
          %753 = sbr.rel (%p751) target = $region48
        $region47: #{tpu_custom_call.1} parent=43 // pred_region
          %s754 = smul.u32 2, %s18
          %p755 = scmp.lt.s32.totalorder %s754, 3
          %s756 = scalar_select %p755, %s754, 3
          %s757 = smul.addr %s756, 2
          %s758 = smul.addr %s757, 8
          %s759 = scalar_lea.vmem %s2, %s758
        $region48: #{tpu_custom_call.1} parent=43 // pred_fallthru
          _
      $region44: #{tpu_custom_call.1} parent=5 // pred_fallthru
        _
    $region6: #{tpu_custom_call.1} parent=1 // loop_footer
      %s16 = sadd.s32 1, %s12
    $region7: #{tpu_custom_call.1} parent=1 // loop_footer_branch
      %11 = sbr.rel target = $region3
    $region8: #{tpu_custom_call.1} parent=1 // loop_exit
      _
    %760 = vsyncpa [#allocation3], 1
    %s761 = scalar_lea.sflag [#allocation3], 1
    %762 = vsyncpa %s761, 1
    %763 = vsyncpa [#allocation5], 1

</llo_original>
